<compile_context>
chip_gen: v7x
topology: tpu7x:2x2x1
jax: 0.10.0
libtpu: 0.0.40
codegen_flags: <defaults>
</compile_context>

<pallas_src>
import jax
import jax.numpy as jnp
from jax.experimental import pallas as pl
from jax.experimental.pallas import tpu as pltpu

SMOOTHING = 0.01
_LANE = 128


def _cdiv(a, b):
    return (a + b - 1) // b


def _vmem_capacity_bytes():
    """Physical VMEM capacity; falls back to the smallest (v7x) size."""
    try:
        return int(pltpu.get_tpu_info().vmem_capacity_bytes)
    except Exception:
        return 64 * 1024 * 1024


def ovl_pallas(y_true, y_pred, *, tile_rows_cap=2048, vmem_input_budget_bytes=None):
    """Pallas implementation of Ovl.forward for NCHW inputs."""
    assert y_true.shape == y_pred.shape, (y_true.shape, y_pred.shape)
    assert y_true.dtype == y_pred.dtype, (y_true.dtype, y_pred.dtype)
    n, c, h, w = y_true.shape
    hw = h * w
    itemsize = jnp.dtype(y_true.dtype).itemsize
    vmem_cap = _vmem_capacity_bytes()

    lane_pad = (-hw) % _LANE
    if lane_pad:
        # Fallback path only (H*W not a multiple of 128): the copy-free
        # (rows, 128) reshape is impossible, so pad the lane remainder.
        # Exact: a padded position is 0 in every channel of both inputs, so it
        # contributes 0 to both the min-sum and the max-sum.  This is the only
        # case that materializes a copy; the common path below is copy-free.
        def _prep(x):
            x = jnp.pad(x.reshape(n, c, hw), ((0, 0), (0, 0), (0, lane_pad)))
            return x.reshape(n, c, (hw + lane_pad) // _LANE, _LANE)
    else:
        def _prep(x):
            # Contiguous reshape: no data movement.
            return x.reshape(n, c, hw // _LANE, _LANE)

    rows = (hw + lane_pad) // _LANE
    yt = _prep(y_true)
    yp = _prep(y_pred)

    # --- Tile-size selection -------------------------------------------------
    # Per block of ONE input: c * tile_rows * 128 * itemsize bytes.
    # 2 inputs x 2 pipeline buffers must fit the input budget.
    if vmem_input_budget_bytes is None:
        vmem_input_budget_bytes = max(8 << 20, min(vmem_cap // 3, 48 << 20))
    bytes_per_row = c * _LANE * itemsize
    max_rows = max(8, (vmem_input_budget_bytes // (4 * bytes_per_row)) // 8 * 8)
    tile_rows = max(8, (min(tile_rows_cap, max_rows) // 8) * 8)
    if tile_rows >= rows:
        tile_rows = rows                      # block == full dim is always legal
    t_tiles = _cdiv(rows, tile_rows)
    needs_row_mask = (rows % tile_rows) != 0  # last tile partially out of bounds
    acc_sub = 8 if (tile_rows % 8 == 0) else 1

    block_bytes = c * tile_rows * _LANE * itemsize
    # Double-buffered inputs + elementwise temporaries + headroom, clamped to
    # the physical capacity of the smallest supported part.
    vmem_limit = int(min(vmem_cap, max(32 << 20, 6 * block_bytes + (16 << 20))))

    # --- Kernel ---------------------------------------------------------------
    def kernel(yt_ref, yp_ref, min_ref, max_ref):
        t = pl.program_id(1)

        @pl.when(t == 0)
        def _init():
            min_ref[...] = jnp.zeros_like(min_ref)
            max_ref[...] = jnp.zeros_like(max_ref)

        # Channel min/max as an elementwise VPU chain over the small leading
        # (non-tiled) channel axis == min/max over cat([yt, yp], dim=1).
        mn = jnp.minimum(yt_ref[0, 0], yp_ref[0, 0])          # (tile_rows, 128)
        mx = jnp.maximum(yt_ref[0, 0], yp_ref[0, 0])
        for ch in range(1, c):
            a = yt_ref[0, ch]
            b = yp_ref[0, ch]
            mn = jnp.minimum(mn, jnp.minimum(a, b))
            mx = jnp.maximum(mx, jnp.maximum(a, b))

        if needs_row_mask:
            # Last row-tile extends past `rows`; out-of-bounds block contents
            # are undefined, so zero them before summing (exact for both sums).
            valid = rows - t * tile_rows
            row_id = jax.lax.broadcasted_iota(jnp.int32, (tile_rows, _LANE), 0)
            keep = row_id < valid
            zero = jnp.zeros_like(mn)
            mn = jnp.where(keep, mn, zero)
            mx = jnp.where(keep, mx, zero)

        if acc_sub == 8:
            # Fold whole native (8,128) tiles with pure VPU adds; the reshape
            # does not cross (8,128) tile boundaries, so it is layout-free.
            pm = jnp.sum(mn.reshape(tile_rows // 8, 8, _LANE).astype(jnp.float32), axis=0)
            px = jnp.sum(mx.reshape(tile_rows // 8, 8, _LANE).astype(jnp.float32), axis=0)
        else:
            # Tiny-input path (tile_rows < 8): single cross-sublane reduce.
            pm = jnp.sum(mn.astype(jnp.float32), axis=0, keepdims=True)
            px = jnp.sum(mx.astype(jnp.float32), axis=0, keepdims=True)

        min_ref[0] = min_ref[0] + pm
        max_ref[0] = max_ref[0] + px

    in_spec = pl.BlockSpec((1, c, tile_rows, _LANE), lambda i, t: (i, 0, t, 0))
    out_spec = pl.BlockSpec((1, acc_sub, _LANE), lambda i, t: (i, 0, 0))

    out_min, out_max = pl.pallas_call(
        kernel,
        out_shape=(
            jax.ShapeDtypeStruct((n, acc_sub, _LANE), jnp.float32),
            jax.ShapeDtypeStruct((n, acc_sub, _LANE), jnp.float32),
        ),
        grid_spec=pl.GridSpec(
            grid=(n, t_tiles),
            in_specs=[in_spec, in_spec],
            out_specs=(out_spec, out_spec),
        ),
        compiler_params=pltpu.CompilerParams(
            dimension_semantics=("parallel", "arbitrary"),
            vmem_limit_bytes=vmem_limit,
        ),
    )(yt, yp)

    s_min = jnp.sum(out_min)
    s_max = jnp.sum(out_max)
    return (s_min + SMOOTHING) / (s_max + SMOOTHING)


def ovl_ref(y_true, y_pred):
    """Pure-JAX reference replicating the PyTorch forward exactly."""
    concat = jnp.concatenate([y_true, y_pred], axis=1)
    num = jnp.min(concat, axis=1).sum() + SMOOTHING
    den = jnp.max(concat, axis=1).sum() + SMOOTHING
    return num / den


def ovl(y_true, y_pred):
    """Dispatcher: tiny inputs go to plain XLA (kernel overhead would dominate)."""
    if y_true.size <= (1 << 14):
        return ovl_ref(y_true, y_pred)
    return ovl_pallas(y_true, y_pred)


if __name__ == "__main__":
    key = jax.random.PRNGKey(0)

    # Primary small shape from the module spec: (N, C, H, W) = (2, 4, 16, 16).
    k1, k2 = jax.random.split(key)
    shape = (2, 4, 16, 16)
    y_true = jax.random.uniform(k1, shape, dtype=jnp.float32)
    y_pred = jax.random.uniform(k2, shape, dtype=jnp.float32)

    # Force the Pallas path (ovl() would dispatch this tiny size to plain XLA).
    got = jax.block_until_ready(ovl_pallas(y_true, y_pred))
    want = jax.block_until_ready(ovl_ref(y_true, y_pred))
    assert jnp.allclose(got, want, rtol=1e-5, atol=1e-6), (got, want)

    # Multi-tile path with a ragged last row-tile (rows=40, tile_rows=16):
    # exercises the in-kernel row masking that replaced jnp.pad.
    k3, k4 = jax.random.split(k2)
    yt2 = jax.random.uniform(k3, (2, 4, 40, 128), dtype=jnp.float32)
    yp2 = jax.random.uniform(k4, (2, 4, 40, 128), dtype=jnp.float32)
    got2 = jax.block_until_ready(ovl_pallas(yt2, yp2, tile_rows_cap=16))
    want2 = jax.block_until_ready(ovl_ref(yt2, yp2))
    assert jnp.allclose(got2, want2, rtol=1e-5, atol=1e-6), (got2, want2)

    # Lane-pad fallback path (H*W not a multiple of 128).
    k5, k6 = jax.random.split(k4)
    yt3 = jax.random.uniform(k5, (2, 4, 24, 20), dtype=jnp.float32)
    yp3 = jax.random.uniform(k6, (2, 4, 24, 20), dtype=jnp.float32)
    got3 = jax.block_until_ready(ovl_pallas(yt3, yp3))
    want3 = jax.block_until_ready(ovl_ref(yt3, yp3))
    assert jnp.allclose(got3, want3, rtol=1e-5, atol=1e-6), (got3, want3)

    # bf16 path, multi-tile: DMA + min/max in bf16, partial sums in f32.
    k7, k8 = jax.random.split(k6)
    yt4 = jax.random.uniform(k7, (2, 4, 128, 128), dtype=jnp.float32).astype(jnp.bfloat16)
    yp4 = jax.random.uniform(k8, (2, 4, 128, 128), dtype=jnp.float32).astype(jnp.bfloat16)
    got4 = jax.block_until_ready(ovl_pallas(yt4, yp4, tile_rows_cap=32))
    want4 = jax.block_until_ready(
        ovl_ref(yt4.astype(jnp.float32), yp4.astype(jnp.float32)))
    assert jnp.allclose(got4, want4, rtol=1e-4, atol=1e-5), (got4, want4)

    print("KERNEL_OK")
</pallas_src>

<mosaic_0001>
module attributes {stable_mosaic.version = 11 : i64} {
  func.func @kernel(%arg0: i32, %arg1: i32, %arg2: memref<1x4x2x128xf32, #tpu.memory_space<vmem>>, %arg3: memref<1x4x2x128xf32, #tpu.memory_space<vmem>>, %arg4: memref<1x1x128xf32, #tpu.memory_space<vmem>>, %arg5: memref<1x1x128xf32, #tpu.memory_space<vmem>>) attributes {dimension_semantics = [#tpu.dimension_semantics<parallel>, #tpu.dimension_semantics<arbitrary>], iteration_bounds = array<i64: 2, 1>, scalar_prefetch = 0 : i64, scratch_operands = 0 : i64, tpu.core_type = #tpu.core_type<tc>, window_params = [{transform_indices = @transform_0, window_bounds = array<i64: 1, 4, 2, 128>}, {transform_indices = @transform_1, window_bounds = array<i64: 1, 4, 2, 128>}, {transform_indices = @transform_2, window_bounds = array<i64: 1, 1, 128>}, {transform_indices = @transform_3, window_bounds = array<i64: 1, 1, 128>}]} {
    %c0_i32 = arith.constant 0 : i32
    %0 = arith.cmpi eq, %arg1, %c0_i32 : i32
    %1 = arith.extui %0 : i1 to i32
    %c0_i32_0 = arith.constant 0 : i32
    %2 = arith.cmpi ne, %1, %c0_i32_0 : i32
    scf.if %2 {
      %cst_50 = arith.constant 0.000000e+00 : f32
      %53 = vector.broadcast %cst_50 : f32 to vector<1x1x128xf32>
      %c0_51 = arith.constant 0 : index
      %c0_52 = arith.constant 0 : index
      %c0_53 = arith.constant 0 : index
      %54 = vector.load %arg4[%c0_51, %c0_52, %c0_53] : memref<1x1x128xf32, #tpu.memory_space<vmem>>, vector<1x1x128xf32>
      tpu.vector_store %arg4[%c0_51, %c0_52, %c0_53], %53 {strides = array<i32>} : memref<1x1x128xf32, #tpu.memory_space<vmem>>, vector<1x1x128xf32>,
      %cst_54 = arith.constant 0.000000e+00 : f32
      %55 = vector.broadcast %cst_54 : f32 to vector<1x1x128xf32>
      %c0_55 = arith.constant 0 : index
      %c0_56 = arith.constant 0 : index
      %c0_57 = arith.constant 0 : index
      %56 = vector.load %arg5[%c0_55, %c0_56, %c0_57] : memref<1x1x128xf32, #tpu.memory_space<vmem>>, vector<1x1x128xf32>
      tpu.vector_store %arg5[%c0_55, %c0_56, %c0_57], %55 {strides = array<i32>} : memref<1x1x128xf32, #tpu.memory_space<vmem>>, vector<1x1x128xf32>,
    } else {
    }
    %c0 = arith.constant 0 : index
    %c0_1 = arith.constant 0 : index
    %c0_2 = arith.constant 0 : index
    %c0_3 = arith.constant 0 : index
    %3 = vector.load %arg2[%c0, %c0_1, %c0_2, %c0_3] : memref<1x4x2x128xf32, #tpu.memory_space<vmem>>, vector<1x1x2x128xf32>
    %4 = vector.shape_cast %3 : vector<1x1x2x128xf32> to vector<2x128xf32>
    %c0_4 = arith.constant 0 : index
    %c0_5 = arith.constant 0 : index
    %c0_6 = arith.constant 0 : index
    %c0_7 = arith.constant 0 : index
    %5 = vector.load %arg3[%c0_4, %c0_5, %c0_6, %c0_7] : memref<1x4x2x128xf32, #tpu.memory_space<vmem>>, vector<1x1x2x128xf32>
    %6 = vector.shape_cast %5 : vector<1x1x2x128xf32> to vector<2x128xf32>
    %7 = arith.minimumf %4, %6 : vector<2x128xf32>
    %c0_8 = arith.constant 0 : index
    %c0_9 = arith.constant 0 : index
    %c0_10 = arith.constant 0 : index
    %c0_11 = arith.constant 0 : index
    %8 = vector.load %arg2[%c0_8, %c0_9, %c0_10, %c0_11] : memref<1x4x2x128xf32, #tpu.memory_space<vmem>>, vector<1x1x2x128xf32>
    %9 = vector.shape_cast %8 : vector<1x1x2x128xf32> to vector<2x128xf32>
    %c0_12 = arith.constant 0 : index
    %c0_13 = arith.constant 0 : index
    %c0_14 = arith.constant 0 : index
    %c0_15 = arith.constant 0 : index
    %10 = vector.load %arg3[%c0_12, %c0_13, %c0_14, %c0_15] : memref<1x4x2x128xf32, #tpu.memory_space<vmem>>, vector<1x1x2x128xf32>
    %11 = vector.shape_cast %10 : vector<1x1x2x128xf32> to vector<2x128xf32>
    %12 = arith.maximumf %9, %11 : vector<2x128xf32>
    %c0_16 = arith.constant 0 : index
    %c1 = arith.constant 1 : index
    %c0_17 = arith.constant 0 : index
    %c0_18 = arith.constant 0 : index
    %13 = vector.load %arg2[%c0_16, %c1, %c0_17, %c0_18] : memref<1x4x2x128xf32, #tpu.memory_space<vmem>>, vector<1x1x2x128xf32>
    %14 = vector.shape_cast %13 : vector<1x1x2x128xf32> to vector<2x128xf32>
    %c0_19 = arith.constant 0 : index
    %c1_20 = arith.constant 1 : index
    %c0_21 = arith.constant 0 : index
    %c0_22 = arith.constant 0 : index
    %15 = vector.load %arg3[%c0_19, %c1_20, %c0_21, %c0_22] : memref<1x4x2x128xf32, #tpu.memory_space<vmem>>, vector<1x1x2x128xf32>
    %16 = vector.shape_cast %15 : vector<1x1x2x128xf32> to vector<2x128xf32>
    %17 = arith.minimumf %14, %16 : vector<2x128xf32>
    %18 = arith.minimumf %7, %17 : vector<2x128xf32>
    %19 = arith.maximumf %14, %16 : vector<2x128xf32>
    %20 = arith.maximumf %12, %19 : vector<2x128xf32>
    %c0_23 = arith.constant 0 : index
    %c2 = arith.constant 2 : index
    %c0_24 = arith.constant 0 : index
    %c0_25 = arith.constant 0 : index
    %21 = vector.load %arg2[%c0_23, %c2, %c0_24, %c0_25] : memref<1x4x2x128xf32, #tpu.memory_space<vmem>>, vector<1x1x2x128xf32>
    %22 = vector.shape_cast %21 : vector<1x1x2x128xf32> to vector<2x128xf32>
    %c0_26 = arith.constant 0 : index
    %c2_27 = arith.constant 2 : index
    %c0_28 = arith.constant 0 : index
    %c0_29 = arith.constant 0 : index
    %23 = vector.load %arg3[%c0_26, %c2_27, %c0_28, %c0_29] : memref<1x4x2x128xf32, #tpu.memory_space<vmem>>, vector<1x1x2x128xf32>
    %24 = vector.shape_cast %23 : vector<1x1x2x128xf32> to vector<2x128xf32>
    %25 = arith.minimumf %22, %24 : vector<2x128xf32>
    %26 = arith.minimumf %18, %25 : vector<2x128xf32>
    %27 = arith.maximumf %22, %24 : vector<2x128xf32>
    %28 = arith.maximumf %20, %27 : vector<2x128xf32>
    %c0_30 = arith.constant 0 : index
    %c3 = arith.constant 3 : index
    %c0_31 = arith.constant 0 : index
    %c0_32 = arith.constant 0 : index
    %29 = vector.load %arg2[%c0_30, %c3, %c0_31, %c0_32] : memref<1x4x2x128xf32, #tpu.memory_space<vmem>>, vector<1x1x2x128xf32>
    %30 = vector.shape_cast %29 : vector<1x1x2x128xf32> to vector<2x128xf32>
    %c0_33 = arith.constant 0 : index
    %c3_34 = arith.constant 3 : index
    %c0_35 = arith.constant 0 : index
    %c0_36 = arith.constant 0 : index
    %31 = vector.load %arg3[%c0_33, %c3_34, %c0_35, %c0_36] : memref<1x4x2x128xf32, #tpu.memory_space<vmem>>, vector<1x1x2x128xf32>
    %32 = vector.shape_cast %31 : vector<1x1x2x128xf32> to vector<2x128xf32>
    %33 = arith.minimumf %30, %32 : vector<2x128xf32>
    %34 = arith.minimumf %26, %33 : vector<2x128xf32>
    %35 = arith.maximumf %30, %32 : vector<2x128xf32>
    %36 = arith.maximumf %28, %35 : vector<2x128xf32>
    %cst = arith.constant dense<0.000000e+00> : vector<128xf32>
    %37 = vector.multi_reduction <add>, %34, %cst [0] : vector<2x128xf32> to vector<128xf32>
    %38 = vector.shape_cast %37 : vector<128xf32> to vector<1x128xf32>
    %cst_37 = arith.constant dense<0.000000e+00> : vector<128xf32>
    %39 = vector.multi_reduction <add>, %36, %cst_37 [0] : vector<2x128xf32> to vector<128xf32>
    %40 = vector.shape_cast %39 : vector<128xf32> to vector<1x128xf32>
    %c0_38 = arith.constant 0 : index
    %c0_39 = arith.constant 0 : index
    %c0_40 = arith.constant 0 : index
    %41 = vector.load %arg4[%c0_38, %c0_39, %c0_40] : memref<1x1x128xf32, #tpu.memory_space<vmem>>, vector<1x1x128xf32>
    %42 = vector.shape_cast %41 : vector<1x1x128xf32> to vector<1x128xf32>
    %43 = arith.addf %42, %38 : vector<1x128xf32>
    %c0_41 = arith.constant 0 : index
    %c0_42 = arith.constant 0 : index
    %c0_43 = arith.constant 0 : index
    %44 = vector.load %arg4[%c0_41, %c0_42, %c0_43] : memref<1x1x128xf32, #tpu.memory_space<vmem>>, vector<1x1x128xf32>
    %45 = vector.shape_cast %44 : vector<1x1x128xf32> to vector<1x128xf32>
    %46 = vector.shape_cast %43 : vector<1x128xf32> to vector<1x1x128xf32>
    tpu.vector_store %arg4[%c0_41, %c0_42, %c0_43], %46 {strides = array<i32>} : memref<1x1x128xf32, #tpu.memory_space<vmem>>, vector<1x1x128xf32>,
    %c0_44 = arith.constant 0 : index
    %c0_45 = arith.constant 0 : index
    %c0_46 = arith.constant 0 : index
    %47 = vector.load %arg5[%c0_44, %c0_45, %c0_46] : memref<1x1x128xf32, #tpu.memory_space<vmem>>, vector<1x1x128xf32>
    %48 = vector.shape_cast %47 : vector<1x1x128xf32> to vector<1x128xf32>
    %49 = arith.addf %48, %40 : vector<1x128xf32>
    %c0_47 = arith.constant 0 : index
    %c0_48 = arith.constant 0 : index
    %c0_49 = arith.constant 0 : index
    %50 = vector.load %arg5[%c0_47, %c0_48, %c0_49] : memref<1x1x128xf32, #tpu.memory_space<vmem>>, vector<1x1x128xf32>
    %51 = vector.shape_cast %50 : vector<1x1x128xf32> to vector<1x128xf32>
    %52 = vector.shape_cast %49 : vector<1x128xf32> to vector<1x1x128xf32>
    tpu.vector_store %arg5[%c0_47, %c0_48, %c0_49], %52 {strides = array<i32>} : memref<1x1x128xf32, #tpu.memory_space<vmem>>, vector<1x1x128xf32>,
    return
  }
  func.func @transform_0(%arg0: i32, %arg1: i32) -> (i32, i32, i32, i32) {
    %c0_i32 = arith.constant 0 : i32
    %c0_i32_0 = arith.constant 0 : i32
    %c0_i32_1 = arith.constant 0 : i32
    return %arg0, %c0_i32, %arg1, %c0_i32_0 : i32, i32, i32, i32
  }
  func.func @transform_1(%arg0: i32, %arg1: i32) -> (i32, i32, i32, i32) {
    %c0_i32 = arith.constant 0 : i32
    %c0_i32_0 = arith.constant 0 : i32
    %c0_i32_1 = arith.constant 0 : i32
    return %arg0, %c0_i32, %arg1, %c0_i32_0 : i32, i32, i32, i32
  }
  func.func @transform_2(%arg0: i32, %arg1: i32) -> (i32, i32, i32) {
    %c0_i32 = arith.constant 0 : i32
    %c0_i32_0 = arith.constant 0 : i32
    %c0_i32_1 = arith.constant 0 : i32
    return %arg0, %c0_i32, %c0_i32_0 : i32, i32, i32
  }
  func.func @transform_3(%arg0: i32, %arg1: i32) -> (i32, i32, i32) {
    %c0_i32 = arith.constant 0 : i32
    %c0_i32_0 = arith.constant 0 : i32
    %c0_i32_1 = arith.constant 0 : i32
    return %arg0, %c0_i32, %c0_i32_0 : i32, i32, i32
  }
}

</mosaic_0001>

<llo_original>
// kernel: tpu_custom_call.1
$region0: #{tpu_custom_call.1}
  #allocation0 [shape = 'u32[]', space=smem, size = 0x4, offset = 0x4, fixed_abs, tag = 'smem constant byte address 0x4 - core index']
  #allocation1 [shape = 'u32[144,128]{1,0:T(1,128)}', space=vmem, size = 0x12000, scoped, tag = 'internal scratch']
  %s0 = inlined_call_operand.hbm [shape: f32[2,4,2,128], index: 0, kind: input, shape index: {}]
  %s1 = inlined_call_operand.hbm [shape: f32[2,4,2,128], index: 1, kind: input, shape index: {}]
  %s2 = inlined_call_operand.hbm [shape: f32[2,1,128], index: 2, kind: output, shape index: {0}]
  %s3 = inlined_call_operand.hbm [shape: f32[2,1,128], index: 3, kind: output, shape index: {1}]
  %4 = xla_tuple %s2, %s3
  %s5 = sld [smem:[#allocation0]]
  $region61: #{tpu_custom_call.1} parent=0
    _
  %s7 = ssub.s32 1, %s5
  %s8 = scalar_select 0, %s7, %s5
  $region1: #{tpu_custom_call.1} parent=0
    #allocation2 [shape = 'u8[8192]{0}', space=vmem, size = 0x2000, scoped, tag = 'input window, operand 0']
    #allocation3 [shape = 's32[2]{0}', space=sflag, size = 0x8, scoped, tag = 'scoped memory for tpu_custom_call.1']
    #allocation4 [shape = 's32[2]{0}', space=sflag, size = 0x8, scoped, tag = 'scoped memory for tpu_custom_call.1']
    #allocation5 [shape = 'u8[8192]{0}', space=vmem, size = 0x2000, scoped, tag = 'input window, operand 1']
    #allocation6 [shape = 's32[2]{0}', space=sflag, size = 0x8, scoped, tag = 'scoped memory for tpu_custom_call.1']
    #allocation7 [shape = 'u8[1024]{0}', space=vmem, size = 0x400, scoped, tag = 'output window, operand 0']
    #allocation8 [shape = 'u8[1024]{0}', space=vmem, size = 0x400, scoped, tag = 'output window, operand 1']
    #allocation9 [shape = 's32[2]{0}', space=sflag, size = 0x8, scoped, tag = 'scoped memory for tpu_custom_call.1']
    %9 = vsyncpa [#allocation3], 0
    %s10 = scalar_lea.sflag [#allocation3], 1
    %11 = vsyncpa %s10, 0
    %12 = vsyncpa [#allocation6], 0
    %s13 = scalar_lea.sflag [#allocation6], 1
    %14 = vsyncpa %s13, 0
    %15 = vsyncpa [#allocation4], 0
    %s16 = scalar_lea.sflag [#allocation4], 1
    %17 = vsyncpa %s16, 0
    %18 = vsyncpa [#allocation9], 0
    %s19 = scalar_lea.sflag [#allocation9], 1
    %20 = vsyncpa %s19, 0
    loop: start=0, step=1, limit=4
    $region2: #{tpu_custom_call.1} parent=1 // loop_pre_header
      _
    $region3: #{tpu_custom_call.1} parent=1 // loop_header
      %s22 = sphi 0, %s26
      %p23 = scmp.ge.s32.totalorder %s22, 4
      %s29 = sphi 0, %s41
      %s30 = sphi 0, %s37
      %s31 = sphi 0, %s29
      %s32 = sphi 0, %s30
      %s33 = sphi 0, %s31
      %s34 = sphi 0, %s32
      %s46 = sphi 0, %s48
      %s49 = sphi 0, %s46
      %s50 = sphi 0, %s49
      %s66 = sphi 0, %s50
      %s74 = sphi 0, %s76
      %s77 = sphi 0, %s74
      %s78 = sphi 0, %s77
      %s94 = sphi 0, %s78
      %s100 = sphi 0, %s102
      %s103 = sphi 0, %s100
      %s104 = sphi 0, %s103
      %s120 = sphi 0, %s104
      %s126 = sphi 0, %s128
      %s129 = sphi 0, %s126
      %s130 = sphi 0, %s129
      %s146 = sphi 0, %s130
    $region4: #{tpu_custom_call.1} parent=1 // loop_header_branch
      %25 = sbr.rel (%p23) target = $region8
    $region5: #{tpu_custom_call.1} parent=1 // loop_body
      %s27 = ssub.s32 %s22, 1
      %s28 = ssub.s32 %s22, 2
      %s35 = sadd.s32 1, %s30
      %p36 = scmp.ge.s32.totalorder %s35, 1
      %s37 = scalar_select %p36, 0, %s35
      %s38 = sadd.s32 1, %s29
      %s39 = scalar_select %p36, %s38, %s29
      %p40 = scmp.ge.s32.totalorder %s39, 2
      %s41 = scalar_select %p40, 0, %s39
      %s42 = ssub.s32 %s29, %s41
      %s43 = ssub.s32 %s30, %s37
      %s44 = sor.u32 %s42, %s43
      %p45 = scmp.eq.s32.totalorder %s44, 0
      %s47 = sadd.s32 %s46, 1
      %s48 = scalar_select %p45, %s46, %s47
      %p51 = pneg %p45
      %p52 = scmp.eq.s32.totalorder %s22, 1
      %p53 = por %p51, %p52
      %p54 = scmp.ne.s32.totalorder %s46, %s49
      %p55 = scmp.eq.s32.totalorder %s22, 0
      %p56 = por %p54, %p55
      %p57 = scmp.ne.s32.totalorder %s46, %s49
      %p58 = scmp.eq.s32.totalorder %s27, 1
      %p59 = por %p57, %p58
      %p60 = scmp.ne.s32.totalorder %s49, %s50
      %p61 = scmp.eq.s32.totalorder %s27, 0
      %p62 = por %p60, %p61
      %p63 = scmp.ne.s32.totalorder %s49, %s50
      %p64 = scmp.eq.s32.totalorder %s28, 1
      %p65 = por %p63, %p64
      %p67 = scmp.ne.s32.totalorder %s50, %s66
      %p68 = scmp.eq.s32.totalorder %s28, 0
      %p69 = por %p67, %p68
      %s70 = ssub.s32 %s29, %s41
      %s71 = ssub.s32 %s30, %s37
      %s72 = sor.u32 %s70, %s71
      %p73 = scmp.eq.s32.totalorder %s72, 0
      %s75 = sadd.s32 %s74, 1
      %s76 = scalar_select %p73, %s74, %s75
      %p79 = pneg %p73
      %p80 = scmp.eq.s32.totalorder %s22, 1
      %p81 = por %p79, %p80
      %p82 = scmp.ne.s32.totalorder %s74, %s77
      %p83 = scmp.eq.s32.totalorder %s22, 0
      %p84 = por %p82, %p83
      %p85 = scmp.ne.s32.totalorder %s74, %s77
      %p86 = scmp.eq.s32.totalorder %s27, 1
      %p87 = por %p85, %p86
      %p88 = scmp.ne.s32.totalorder %s77, %s78
      %p89 = scmp.eq.s32.totalorder %s27, 0
      %p90 = por %p88, %p89
      %p91 = scmp.ne.s32.totalorder %s77, %s78
      %p92 = scmp.eq.s32.totalorder %s28, 1
      %p93 = por %p91, %p92
      %p95 = scmp.ne.s32.totalorder %s78, %s94
      %p96 = scmp.eq.s32.totalorder %s28, 0
      %p97 = por %p95, %p96
      %s98 = ssub.s32 %s29, %s41
      %p99 = scmp.eq.s32.totalorder %s98, 0
      %s101 = sadd.s32 %s100, 1
      %s102 = scalar_select %p99, %s100, %s101
      %p105 = pneg %p99
      %p106 = scmp.eq.s32.totalorder %s22, 1
      %p107 = por %p105, %p106
      %p108 = scmp.ne.s32.totalorder %s100, %s103
      %p109 = scmp.eq.s32.totalorder %s22, 0
      %p110 = por %p108, %p109
      %p111 = scmp.ne.s32.totalorder %s100, %s103
      %p112 = scmp.eq.s32.totalorder %s27, 1
      %p113 = por %p111, %p112
      %p114 = scmp.ne.s32.totalorder %s103, %s104
      %p115 = scmp.eq.s32.totalorder %s27, 0
      %p116 = por %p114, %p115
      %p117 = scmp.ne.s32.totalorder %s103, %s104
      %p118 = scmp.eq.s32.totalorder %s28, 1
      %p119 = por %p117, %p118
      %p121 = scmp.ne.s32.totalorder %s104, %s120
      %p122 = scmp.eq.s32.totalorder %s28, 0
      %p123 = por %p121, %p122
      %s124 = ssub.s32 %s29, %s41
      %p125 = scmp.eq.s32.totalorder %s124, 0
      %s127 = sadd.s32 %s126, 1
      %s128 = scalar_select %p125, %s126, %s127
      %p131 = pneg %p125
      %p132 = scmp.eq.s32.totalorder %s22, 1
      %p133 = por %p131, %p132
      %p134 = scmp.ne.s32.totalorder %s126, %s129
      %p135 = scmp.eq.s32.totalorder %s22, 0
      %p136 = por %p134, %p135
      %p137 = scmp.ne.s32.totalorder %s126, %s129
      %p138 = scmp.eq.s32.totalorder %s27, 1
      %p139 = por %p137, %p138
      %p140 = scmp.ne.s32.totalorder %s129, %s130
      %p141 = scmp.eq.s32.totalorder %s27, 0
      %p142 = por %p140, %p141
      %p143 = scmp.ne.s32.totalorder %s129, %s130
      %p144 = scmp.eq.s32.totalorder %s28, 1
      %p145 = por %p143, %p144
      %p147 = scmp.ne.s32.totalorder %s130, %s146
      %p148 = scmp.eq.s32.totalorder %s28, 0
      %p149 = por %p147, %p148
      %p150 = scmp.le.s32.totalorder 1, %s22
      %p151 = scmp.lt.s32.totalorder %s22, 3
      %p152 = pnand %p150, %p151
      %p153 = pneg %p152
      // Predicated region
      $region9: #{tpu_custom_call.1} parent=5 // pred_check
        _
      $region10: #{tpu_custom_call.1} parent=5 // pred_check_branch
        %155 = sbr.rel (%p152) target = $region12
      $region11: #{tpu_custom_call.1} parent=5 // pred_region
        %s156 = ssub.s32 %s22, 1
      $region12: #{tpu_custom_call.1} parent=5 // pred_fallthru
        _
      %p157 = scmp.lt.s32.totalorder %s22, 2
      // Predicated region
      $region13: #{tpu_custom_call.1} parent=5 // pred_check
        %p158 = pneg %p157
      $region14: #{tpu_custom_call.1} parent=5 // pred_check_branch
        %160 = sbr.rel (%p158) target = $region16
      $region15: #{tpu_custom_call.1} parent=5 // pred_region
        // Predicated region
        $region17: #{tpu_custom_call.1} parent=15 // pred_check
          %p161 = pneg %p56
        $region18: #{tpu_custom_call.1} parent=15 // pred_check_branch
          %163 = sbr.rel (%p161) target = $region20
        $region19: #{tpu_custom_call.1} parent=15 // pred_region
          %s164 = sand.u32 %s46, 1
          %s165 = scalar_lea.sflag [#allocation3], %s164
          %s166 = sand.u32 %s46, 1
          %s167 = smul.addr %s166, 8
          %s168 = scalar_lea.vmem [#allocation2], %s167
          %s170 = ssub.s32 128, 128
          %171 = vsyncadd %s165, %s170
          %s172 = smul.addr %s29, 4
          %s173 = sadd.s32 %s30, %s172
          %s174 = smul.addr %s173, 32
          %s175 = scalar_lea.hbm %s0, %s174
          %s176 = sshll.u32 %s168, 4
          %s177 = int_to_ptr.vmem [resolvable:$true] %s176
          %182 = dma.hbm_to_vmem [thread:$0]  %s175, 128, %s177, %s165, 32, 32, 2
        $region20: #{tpu_custom_call.1} parent=15 // pred_fallthru
          _
        // Predicated region
        $region21: #{tpu_custom_call.1} parent=15 // pred_check
          %p183 = pneg %p84
        $region22: #{tpu_custom_call.1} parent=15 // pred_check_branch
          %185 = sbr.rel (%p183) target = $region24
        $region23: #{tpu_custom_call.1} parent=15 // pred_region
          %s186 = sand.u32 %s74, 1
          %s187 = scalar_lea.sflag [#allocation6], %s186
          %s188 = sand.u32 %s74, 1
          %s189 = smul.addr %s188, 8
          %s190 = scalar_lea.vmem [#allocation5], %s189
          %s192 = ssub.s32 128, 128
          %193 = vsyncadd %s187, %s192
          %s194 = smul.addr %s29, 4
          %s195 = sadd.s32 %s30, %s194
          %s196 = smul.addr %s195, 32
          %s197 = scalar_lea.hbm %s1, %s196
          %s198 = sshll.u32 %s190, 4
          %s199 = int_to_ptr.vmem [resolvable:$true] %s198
          %204 = dma.hbm_to_vmem [thread:$0]  %s197, 128, %s199, %s187, 32, 32, 2
        $region24: #{tpu_custom_call.1} parent=15 // pred_fallthru
          _
      $region16: #{tpu_custom_call.1} parent=5 // pred_fallthru
        _
      %p205 = scmp.le.s32.totalorder 1, %s22
      %p206 = scmp.lt.s32.totalorder %s22, 3
      %p207 = pnand %p205, %p206
      %p208 = pneg %p207
      // Predicated region
      $region25: #{tpu_custom_call.1} parent=5 // pred_check
        _
      $region26: #{tpu_custom_call.1} parent=5 // pred_check_branch
        %210 = sbr.rel (%p207) target = $region28
      $region27: #{tpu_custom_call.1} parent=5 // pred_region
        %s211 = ssub.s32 %s22, 1
        %s212 = sand.u32 %s49, 1
        %s213 = scalar_lea.sflag [#allocation3], %s212
        %s214 = sand.u32 %s49, 1
        %s215 = smul.addr %s214, 8
        %s216 = scalar_lea.vmem [#allocation2], %s215
        // Predicated region
        $region29: #{tpu_custom_call.1} parent=27 // pred_check
          %p217 = pneg %p62
        $region30: #{tpu_custom_call.1} parent=27 // pred_check_branch
          %219 = sbr.rel (%p217) target = $region32
        $region31: #{tpu_custom_call.1} parent=27 // pred_region
          %220 = dma.done %s213, 128
        $region32: #{tpu_custom_call.1} parent=27 // pred_fallthru
          _
        %s221 = sand.u32 %s77, 1
        %s222 = scalar_lea.sflag [#allocation6], %s221
        %s223 = sand.u32 %s77, 1
        %s224 = smul.addr %s223, 8
        %s225 = scalar_lea.vmem [#allocation5], %s224
        // Predicated region
        $region33: #{tpu_custom_call.1} parent=27 // pred_check
          %p226 = pneg %p90
        $region34: #{tpu_custom_call.1} parent=27 // pred_check_branch
          %228 = sbr.rel (%p226) target = $region36
        $region35: #{tpu_custom_call.1} parent=27 // pred_region
          %229 = dma.done %s222, 128
        $region36: #{tpu_custom_call.1} parent=27 // pred_fallthru
          _
        %s230 = sand.u32 %s49, 1
        %s231 = scalar_lea.sflag [#allocation3], %s230
        %s232 = sand.u32 %s49, 1
        %s233 = smul.addr %s232, 8
        %s234 = scalar_lea.vmem [#allocation2], %s233
        %p235 = pneg %p62
        %p236 = pneg %p59
        %s237 = sand.u32 %s77, 1
        %s238 = scalar_lea.sflag [#allocation6], %s237
        %s239 = sand.u32 %s77, 1
        %s240 = smul.addr %s239, 8
        %s241 = scalar_lea.vmem [#allocation5], %s240
        %p242 = pneg %p90
        %p243 = pneg %p87
        %p244 = pneg %p116
        %p245 = pneg %p113
        %s246 = sand.u32 %s103, 1
        %s247 = scalar_lea.sflag [#allocation4], %s246
        %s248 = sand.u32 %s103, 1
        %s249 = scalar_lea.vmem [#allocation7], %s248
        %p250 = pneg %p142
        %p251 = pneg %p139
        %s252 = sand.u32 %s129, 1
        %s253 = scalar_lea.sflag [#allocation9], %s252
        %s254 = sand.u32 %s129, 1
        %s255 = scalar_lea.vmem [#allocation8], %s254
        %p256 = scmp.eq.s32.totalorder %s32, 0
        // Predicated region
        $region37: #{tpu_custom_call.1} parent=27 // pred_check
          %p257 = pneg %p256
        $region38: #{tpu_custom_call.1} parent=27 // pred_check_branch
          %259 = sbr.rel (%p257) target = $region40
        $region39: #{tpu_custom_call.1} parent=27 // pred_region
          %260 = vst [vmem:[%s249] sm:$0x1] 0.0
          %261 = vst [vmem:[%s255] sm:$0x1] 0.0
        $region40: #{tpu_custom_call.1} parent=27 // pred_fallthru
          _
        %v262 = vld [vmem:[%s216] sm:$0x3]
        %v263 = vld [vmem:[%s225] sm:$0x3]
        %v264 = vmin.f32 %v262, %v263
        %v265 = vmax.f32 %v262, %v263
        %s266 = scalar_lea.vmem %s216, 2 [#allocation2]
        %v267 = vld [vmem:[%s266] sm:$0x3]
        %s268 = scalar_lea.vmem %s225, 2 [#allocation5]
        %v269 = vld [vmem:[%s268] sm:$0x3]
        %v270 = vmin.f32 %v267, %v269
        %v271 = vmin.f32 %v264, %v270
        %v272 = vmax.f32 %v267, %v269
        %v273 = vmax.f32 %v265, %v272
        %s274 = scalar_lea.vmem %s216, 4 [#allocation2]
        %v275 = vld [vmem:[%s274] sm:$0x3]
        %s276 = scalar_lea.vmem %s225, 4 [#allocation5]
        %v277 = vld [vmem:[%s276] sm:$0x3]
        %v278 = vmin.f32 %v275, %v277
        %v279 = vmin.f32 %v271, %v278
        %v280 = vmax.f32 %v275, %v277
        %v281 = vmax.f32 %v273, %v280
        %s282 = scalar_lea.vmem %s216, 6 [#allocation2]
        %v283 = vld [vmem:[%s282] sm:$0x3]
        %s284 = scalar_lea.vmem %s225, 6 [#allocation5]
        %v285 = vld [vmem:[%s284] sm:$0x3]
        %v286 = vmin.f32 %v283, %v285
        %v287 = vmin.f32 %v279, %v286
        %v288 = vmax.f32 %v283, %v285
        %v289 = vmax.f32 %v281, %v288
        %vm290 = vcmask 1041408
        %v291 = vsel %vm290, %v287, 0.0
        %v292 = vrot.slane %v291, 4
        %v293 = vadd.f32 %v291, %v292
        %v294 = vrot.slane %v293, 2
        %v295 = vadd.f32 %v293, %v294
        %v296 = vrot.slane %v295, 1
        %v297 = vadd.f32 %v295, %v296
        %v298 = vsel %vm290, %v289, 0.0
        %v299 = vrot.slane %v298, 4
        %v300 = vadd.f32 %v298, %v299
        %v301 = vrot.slane %v300, 2
        %v302 = vadd.f32 %v300, %v301
        %v303 = vrot.slane %v302, 1
        %v304 = vadd.f32 %v302, %v303
        %v305 = vld [vmem:[%s249] sm:$0x1]
        %v306 = vadd.f32 %v305, %v297
        %307 = vst [vmem:[%s249] sm:$0x1] %v306
        %v308 = vld [vmem:[%s255] sm:$0x1]
        %v309 = vadd.f32 %v308, %v304
        %310 = vst [vmem:[%s255] sm:$0x1] %v309
        %s311 = sand.u32 %s103, 1
        %s312 = scalar_lea.sflag [#allocation4], %s311
        %s313 = sand.u32 %s103, 1
        %s314 = scalar_lea.vmem [#allocation7], %s313
        %s315 = sand.u32 %s129, 1
        %s316 = scalar_lea.sflag [#allocation9], %s315
        %s317 = sand.u32 %s129, 1
        %s318 = scalar_lea.vmem [#allocation8], %s317
        // Predicated region
        $region41: #{tpu_custom_call.1} parent=27 // pred_check
          %p319 = pneg %p113
        $region42: #{tpu_custom_call.1} parent=27 // pred_check_branch
          %321 = sbr.rel (%p319) target = $region44
        $region43: #{tpu_custom_call.1} parent=27 // pred_region
          %s323 = ssub.s32 16, 16
          %324 = vsyncadd %s312, %s323
          %s325 = smul.addr %s31, 16
          %s326 = scalar_lea.hbm %s2, %s325
          %s328 = sshll.u32 %s314, 4
          %s329 = int_to_ptr.vmem [resolvable:$true] %s328
          %331 = dma.vmem_to_hbm [thread:$0]  %s329, 16, %s326, %s312
        $region44: #{tpu_custom_call.1} parent=27 // pred_fallthru
          _
        // Predicated region
        $region45: #{tpu_custom_call.1} parent=27 // pred_check
          %p332 = pneg %p139
        $region46: #{tpu_custom_call.1} parent=27 // pred_check_branch
          %334 = sbr.rel (%p332) target = $region48
        $region47: #{tpu_custom_call.1} parent=27 // pred_region
          %s336 = ssub.s32 16, 16
          %337 = vsyncadd %s316, %s336
          %s338 = smul.addr %s31, 16
          %s339 = scalar_lea.hbm %s3, %s338
          %s341 = sshll.u32 %s318, 4
          %s342 = int_to_ptr.vmem [resolvable:$true] %s341
          %344 = dma.vmem_to_hbm [thread:$0]  %s342, 16, %s339, %s316
        $region48: #{tpu_custom_call.1} parent=27 // pred_fallthru
          _
      $region28: #{tpu_custom_call.1} parent=5 // pred_fallthru
        _
      %p345 = scmp.le.s32.totalorder 2, %s22
      // Predicated region
      $region49: #{tpu_custom_call.1} parent=5 // pred_check
        %p346 = pneg %p345
      $region50: #{tpu_custom_call.1} parent=5 // pred_check_branch
        %348 = sbr.rel (%p346) target = $region52
      $region51: #{tpu_custom_call.1} parent=5 // pred_region
        %s349 = ssub.s32 %s22, 2
        // Predicated region
        $region53: #{tpu_custom_call.1} parent=51 // pred_check
          %p350 = pneg %p119
        $region54: #{tpu_custom_call.1} parent=51 // pred_check_branch
          %352 = sbr.rel (%p350) target = $region56
        $region55: #{tpu_custom_call.1} parent=51 // pred_region
          %s353 = sand.u32 %s104, 1
          %s354 = scalar_lea.sflag [#allocation4], %s353
          %s355 = sand.u32 %s104, 1
          %s356 = scalar_lea.vmem [#allocation7], %s355
          %357 = dma.done %s354, 16
        $region56: #{tpu_custom_call.1} parent=51 // pred_fallthru
          _
        // Predicated region
        $region57: #{tpu_custom_call.1} parent=51 // pred_check
          %p358 = pneg %p145
        $region58: #{tpu_custom_call.1} parent=51 // pred_check_branch
          %360 = sbr.rel (%p358) target = $region60
        $region59: #{tpu_custom_call.1} parent=51 // pred_region
          %s361 = sand.u32 %s130, 1
          %s362 = scalar_lea.sflag [#allocation9], %s361
          %s363 = sand.u32 %s130, 1
          %s364 = scalar_lea.vmem [#allocation8], %s363
          %365 = dma.done %s362, 16
        $region60: #{tpu_custom_call.1} parent=51 // pred_fallthru
          _
      $region52: #{tpu_custom_call.1} parent=5 // pred_fallthru
        _
    $region6: #{tpu_custom_call.1} parent=1 // loop_footer
      %s26 = sadd.s32 1, %s22
    $region7: #{tpu_custom_call.1} parent=1 // loop_footer_branch
      %21 = sbr.rel target = $region3
    $region8: #{tpu_custom_call.1} parent=1 // loop_exit
      _
    %366 = vsyncpa [#allocation3], 1
    %s367 = scalar_lea.sflag [#allocation3], 1
    %368 = vsyncpa %s367, 1
    %369 = vsyncpa [#allocation6], 1
    %s370 = scalar_lea.sflag [#allocation6], 1
    %371 = vsyncpa %s370, 1
    %372 = vsyncpa [#allocation4], 1
    %s373 = scalar_lea.sflag [#allocation4], 1
    %374 = vsyncpa %s373, 1
    %375 = vsyncpa [#allocation9], 1
    %s376 = scalar_lea.sflag [#allocation9], 1
    %377 = vsyncpa %s376, 1

</llo_original>
